<compile_context>
chip_gen: v6e
topology: v6e:2x2x1
jax: 0.10.0
libtpu: 0.0.40
codegen_flags: <defaults>
</compile_context>

<pallas_src>
import functools

import jax
import jax.numpy as jnp
from jax.experimental import pallas as pl
from jax.experimental.pallas import tpu as pltpu

BN_EPS = 1e-5
_VMEM_LIMIT = 32 * 1024 * 1024  # safe on v5e/v6e/v7x; tiles use a tiny fraction of this


def _round_up(a, m):
    return (a + m - 1) // m * m


def _stats_kernel(x_ref, mean_x_ref, w_ref, inv_std_ref, *, n_rows, block_rows, eps):
    """Pass 1: accumulate centered sum-of-squares per output column; finalize inv_std."""
    i = pl.program_id(0)

    @pl.when(i == 0)
    def _init():
        inv_std_ref[...] = jnp.zeros_like(inv_std_ref)

    # Center x by the batch mean BEFORE the matmul: (x - mean_x) @ W == y - mean_y exactly
    # (linearity), so the per-column sum of squares below is the centered second moment.
    xc = x_ref[...].astype(jnp.float32) - mean_x_ref[...]
    if n_rows % block_rows != 0:
        # Mask out-of-range rows of the final partial tile so they contribute zero.
        row = jax.lax.broadcasted_iota(jnp.int32, xc.shape, 0) + i * block_rows
        xc = jnp.where(row < n_rows, xc, 0.0)

    yc = jnp.dot(xc, w_ref[...].astype(jnp.float32),
                 preferred_element_type=jnp.float32,
                 precision=jax.lax.Precision.HIGHEST)
    inv_std_ref[...] += jnp.sum(yc * yc, axis=0, keepdims=True)

    @pl.when(i == pl.num_programs(0) - 1)
    def _finalize():
        var = inv_std_ref[...] / n_rows  # biased batch variance (training-mode BN forward)
        inv_std_ref[...] = jax.lax.rsqrt(var + eps)


def _normalize_kernel(x_ref, mean_x_ref, w_ref, gamma_ref, beta_ref, inv_std_ref,
                      out_ref, *, n_out):
    """Pass 2: y_c = (x - mean_x) @ W, scale/shift + ReLU, write final (rows, O+I) slab."""
    x = x_ref[...]
    xc = x.astype(jnp.float32) - mean_x_ref[...]
    yc = jnp.dot(xc, w_ref[...].astype(jnp.float32),
                 preferred_element_type=jnp.float32,
                 precision=jax.lax.Precision.HIGHEST)
    scale = inv_std_ref[...] * gamma_ref[...]
    act = jnp.maximum(yc * scale + beta_ref[...], 0.0)
    # Two static-slice stores (masked vst for the 32/16-lane sub-ranges is second-order
    # next to avoiding the padded-slab writeback + wrapper concat round trip).
    out_ref[:, :n_out] = act.astype(out_ref.dtype)
    out_ref[:, n_out:] = x.astype(out_ref.dtype)


def prepare_params(w, b, gamma, beta):
    """One-time parameter preparation (hoisted out of the per-call forward path).

    w:     (O, I) nn.Linear weight (PyTorch layout).
    b:     nn.Linear bias.  Dropped: BatchNorm's batch-mean subtraction cancels it exactly.
    gamma: (O,) BatchNorm1d weight.   beta: (O,) BatchNorm1d bias.
    Returns (w_t (I, O), gamma (1, O), beta (1, O)), all f32.
    """
    del b
    o = w.shape[0]
    return (jnp.asarray(w, jnp.float32).T,
            jnp.asarray(gamma, jnp.float32).reshape(1, o),
            jnp.asarray(beta, jnp.float32).reshape(1, o))


def residual_forward(x, w_t, gamma, beta, *, block_rows=1024):
    """Forward pass of Residual: concat([relu(bn(fc(x))), x], axis=1).

    x:     (N, I) input; BatchNorm statistics are taken over this batch axis.
    w_t:   (I, O) transposed Linear weight (from prepare_params).
    gamma: (1, O) BN weight.   beta: (1, O) BN bias.
    Returns (N, O + I) float32.
    """
    n, i_dim = x.shape
    o_dim = w_t.shape[1]
    gamma = gamma.reshape(1, o_dim)
    beta = beta.reshape(1, o_dim)

    # Row tile: multiple of 8 sublanes, capped for VMEM/pipelining.
    tm = min(_round_up(max(n, 1), 8), _round_up(block_rows, 8))
    num_tiles = pl.cdiv(n, tm)

    # Exact batch mean of x; the fc-output mean follows by linearity (mean_x @ W),
    # which both Pallas passes apply by centering x before the matmul.
    mean_x = jnp.mean(x.astype(jnp.float32), axis=0, keepdims=True)

    x_spec = pl.BlockSpec((tm, i_dim), lambda i: (i, 0))
    const = lambda shape: pl.BlockSpec(shape, lambda i: tuple(0 for _ in shape))

    # Pass 1: inv_std over the whole batch (accumulator resident across the grid).
    inv_std = pl.pallas_call(
        functools.partial(_stats_kernel, n_rows=n, block_rows=tm, eps=BN_EPS),
        grid=(num_tiles,),
        in_specs=[x_spec, const((1, i_dim)), const((i_dim, o_dim))],
        out_specs=const((1, o_dim)),
        out_shape=jax.ShapeDtypeStruct((1, o_dim), jnp.float32),
        compiler_params=pltpu.CompilerParams(
            dimension_semantics=("arbitrary",),  # reduction over row tiles
            vmem_limit_bytes=_VMEM_LIMIT),
    )(x, mean_x, w_t)

    # Pass 2: normalize + ReLU and emit the final (N, O + I) slab directly.
    out = pl.pallas_call(
        functools.partial(_normalize_kernel, n_out=o_dim),
        grid=(num_tiles,),
        in_specs=[x_spec, const((1, i_dim)), const((i_dim, o_dim)),
                  const((1, o_dim)), const((1, o_dim)), const((1, o_dim))],
        out_specs=pl.BlockSpec((tm, o_dim + i_dim), lambda i: (i, 0)),
        out_shape=jax.ShapeDtypeStruct((n, o_dim + i_dim), jnp.float32),
        compiler_params=pltpu.CompilerParams(
            dimension_semantics=("parallel",),  # rows are independent -> megacore on v7x
            vmem_limit_bytes=_VMEM_LIMIT),
    )(x, mean_x, w_t, gamma, beta, inv_std)
    return out


if __name__ == "__main__":
    # Small shapes consistent with the module: batch=8, in_features=16, out_features=32.
    N, I, O = 8, 16, 32

    key = jax.random.PRNGKey(0)
    kx, kw, kb = jax.random.split(key, 3)

    x = jax.random.normal(kx, (N, I), dtype=jnp.float32)

    # nn.Linear(i, o): weight (O, I), bias (O,); BatchNorm1d defaults: gamma=1, beta=0.
    bound = 1.0 / (I ** 0.5)
    w = jax.random.uniform(kw, (O, I), minval=-bound, maxval=bound, dtype=jnp.float32)
    b = jax.random.uniform(kb, (O,), minval=-bound, maxval=bound, dtype=jnp.float32)
    gamma0 = jnp.ones((O,), dtype=jnp.float32)
    beta0 = jnp.zeros((O,), dtype=jnp.float32)

    w_t, gamma, beta = prepare_params(w, b, gamma0, beta0)
    out = jax.jit(residual_forward)(x, w_t, gamma, beta)
    out = jax.block_until_ready(out)

    # Reference in plain JAX (bias INCLUDED here -- it must cancel under batch norm).
    y = jnp.dot(x, w_t, precision=jax.lax.Precision.HIGHEST) + b[None, :]
    mean = jnp.mean(y, axis=0, keepdims=True)
    var = jnp.mean((y - mean) ** 2, axis=0, keepdims=True)
    ref_act = jnp.maximum((y - mean) * jax.lax.rsqrt(var + BN_EPS) * gamma + beta, 0.0)
    ref = jnp.concatenate([ref_act, x], axis=1)

    assert out.shape == (N, O + I)
    assert jnp.allclose(out, ref, atol=1e-5, rtol=1e-5), float(jnp.max(jnp.abs(out - ref)))

    print("KERNEL_OK")
</pallas_src>

<mosaic_0001>
module attributes {stable_mosaic.version = 11 : i64} {
  func.func @_stats_kernel(%arg0: i32, %arg1: memref<8x16xf32, #tpu.memory_space<vmem>>, %arg2: memref<1x16xf32, #tpu.memory_space<vmem>>, %arg3: memref<16x32xf32, #tpu.memory_space<vmem>>, %arg4: memref<1x32xf32, #tpu.memory_space<vmem>>) attributes {dimension_semantics = [#tpu.dimension_semantics<arbitrary>], iteration_bounds = array<i64: 1>, scalar_prefetch = 0 : i64, scratch_operands = 0 : i64, tpu.core_type = #tpu.core_type<tc>, window_params = [{transform_indices = @transform_0, window_bounds = array<i64: 8, 16>}, {pipeline_mode = #tpu.pipeline_mode<synchronous>, transform_indices = @transform_1, window_bounds = array<i64: 1, 16>}, {pipeline_mode = #tpu.pipeline_mode<synchronous>, transform_indices = @transform_2, window_bounds = array<i64: 16, 32>}, {pipeline_mode = #tpu.pipeline_mode<synchronous>, transform_indices = @transform_3, window_bounds = array<i64: 1, 32>}]} {
    %c0_i32 = arith.constant 0 : i32
    %0 = arith.cmpi eq, %arg0, %c0_i32 : i32
    %1 = arith.extui %0 : i1 to i32
    %c0_i32_0 = arith.constant 0 : i32
    %2 = arith.cmpi ne, %1, %c0_i32_0 : i32
    scf.if %2 {
      %cst_13 = arith.constant 0.000000e+00 : f32
      %18 = vector.broadcast %cst_13 : f32 to vector<1x32xf32>
      %c0_14 = arith.constant 0 : index
      %c0_15 = arith.constant 0 : index
      %19 = vector.load %arg4[%c0_14, %c0_15] : memref<1x32xf32, #tpu.memory_space<vmem>>, vector<1x32xf32>
      tpu.vector_store %arg4[%c0_14, %c0_15], %18 {strides = array<i32>} : memref<1x32xf32, #tpu.memory_space<vmem>>, vector<1x32xf32>,
    } else {
    }
    %c0 = arith.constant 0 : index
    %c0_1 = arith.constant 0 : index
    %3 = vector.load %arg1[%c0, %c0_1] : memref<8x16xf32, #tpu.memory_space<vmem>>, vector<8x16xf32>
    %c0_2 = arith.constant 0 : index
    %c0_3 = arith.constant 0 : index
    %4 = vector.load %arg2[%c0_2, %c0_3] : memref<1x16xf32, #tpu.memory_space<vmem>>, vector<1x16xf32>
    %5 = vector.broadcast %4 : vector<1x16xf32> to vector<8x16xf32>
    %6 = arith.subf %3, %5 : vector<8x16xf32>
    %c0_4 = arith.constant 0 : index
    %c0_5 = arith.constant 0 : index
    %7 = vector.load %arg3[%c0_4, %c0_5] : memref<16x32xf32, #tpu.memory_space<vmem>>, vector<16x32xf32>
    %cst = arith.constant dense<0.000000e+00> : vector<8x32xf32>
    %8 = tpu.matmul %6, %7, %cst {dimension_numbers = #tpu.dot_dimension_numbers<[1], [0], [0], [1], [0, 0, 1, 1], [], []>, precision = #tpu.contract_precision<fp32>} : vector<8x16xf32>, vector<16x32xf32>, vector<8x32xf32> -> vector<8x32xf32>
    %c0_6 = arith.constant 0 : index
    %c0_7 = arith.constant 0 : index
    %9 = vector.load %arg4[%c0_6, %c0_7] : memref<1x32xf32, #tpu.memory_space<vmem>>, vector<1x32xf32>
    %10 = arith.mulf %8, %8 : vector<8x32xf32>
    %cst_8 = arith.constant dense<0.000000e+00> : vector<32xf32>
    %11 = vector.multi_reduction <add>, %10, %cst_8 [0] : vector<8x32xf32> to vector<32xf32>
    %12 = vector.shape_cast %11 : vector<32xf32> to vector<1x32xf32>
    %13 = arith.addf %9, %12 : vector<1x32xf32>
    %c0_9 = arith.constant 0 : index
    %c0_10 = arith.constant 0 : index
    %14 = vector.load %arg4[%c0_9, %c0_10] : memref<1x32xf32, #tpu.memory_space<vmem>>, vector<1x32xf32>
    tpu.vector_store %arg4[%c0_9, %c0_10], %13 {strides = array<i32>} : memref<1x32xf32, #tpu.memory_space<vmem>>, vector<1x32xf32>,
    %c0_i32_11 = arith.constant 0 : i32
    %15 = arith.cmpi eq, %arg0, %c0_i32_11 : i32
    %16 = arith.extui %15 : i1 to i32
    %c0_i32_12 = arith.constant 0 : i32
    %17 = arith.cmpi ne, %16, %c0_i32_12 : i32
    scf.if %17 {
      %c0_13 = arith.constant 0 : index
      %c0_14 = arith.constant 0 : index
      %18 = vector.load %arg4[%c0_13, %c0_14] : memref<1x32xf32, #tpu.memory_space<vmem>>, vector<1x32xf32>
      %cst_15 = arith.constant 8.000000e+00 : f32
      %19 = vector.broadcast %cst_15 : f32 to vector<1x32xf32>
      %20 = arith.divf %18, %19 : vector<1x32xf32>
      %cst_16 = arith.constant 9.99999974E-6 : f32
      %21 = vector.broadcast %cst_16 : f32 to vector<1x32xf32>
      %22 = arith.addf %20, %21 : vector<1x32xf32>
      %23 = math.rsqrt %22 : vector<1x32xf32>
      %c0_17 = arith.constant 0 : index
      %c0_18 = arith.constant 0 : index
      %24 = vector.load %arg4[%c0_17, %c0_18] : memref<1x32xf32, #tpu.memory_space<vmem>>, vector<1x32xf32>
      tpu.vector_store %arg4[%c0_17, %c0_18], %23 {strides = array<i32>} : memref<1x32xf32, #tpu.memory_space<vmem>>, vector<1x32xf32>,
    } else {
    }
    return
  }
  func.func @transform_0(%arg0: i32) -> (i32, i32) {
    %c0_i32 = arith.constant 0 : i32
    %c0_i32_0 = arith.constant 0 : i32
    return %arg0, %c0_i32 : i32, i32
  }
  func.func @transform_1(%arg0: i32) -> (i32, i32) {
    %c0_i32 = arith.constant 0 : i32
    %c0_i32_0 = arith.constant 0 : i32
    %c0_i32_1 = arith.constant 0 : i32
    return %c0_i32, %c0_i32_0 : i32, i32
  }
  func.func @transform_2(%arg0: i32) -> (i32, i32) {
    %c0_i32 = arith.constant 0 : i32
    %c0_i32_0 = arith.constant 0 : i32
    %c0_i32_1 = arith.constant 0 : i32
    return %c0_i32, %c0_i32_0 : i32, i32
  }
  func.func @transform_3(%arg0: i32) -> (i32, i32) {
    %c0_i32 = arith.constant 0 : i32
    %c0_i32_0 = arith.constant 0 : i32
    %c0_i32_1 = arith.constant 0 : i32
    return %c0_i32, %c0_i32_0 : i32, i32
  }
}

module attributes {stable_mosaic.version = 11 : i64} {
  func.func @_normalize_kernel(%arg0: i32, %arg1: memref<8x16xf32, #tpu.memory_space<vmem>>, %arg2: memref<1x16xf32, #tpu.memory_space<vmem>>, %arg3: memref<16x32xf32, #tpu.memory_space<vmem>>, %arg4: memref<1x32xf32, #tpu.memory_space<vmem>>, %arg5: memref<1x32xf32, #tpu.memory_space<vmem>>, %arg6: memref<1x32xf32, #tpu.memory_space<vmem>>, %arg7: memref<8x48xf32, #tpu.memory_space<vmem>>) attributes {dimension_semantics = [#tpu.dimension_semantics<parallel>], iteration_bounds = array<i64: 1>, scalar_prefetch = 0 : i64, scratch_operands = 0 : i64, tpu.core_type = #tpu.core_type<tc>, window_params = [{transform_indices = @transform_0, window_bounds = array<i64: 8, 16>}, {pipeline_mode = #tpu.pipeline_mode<synchronous>, transform_indices = @transform_1, window_bounds = array<i64: 1, 16>}, {pipeline_mode = #tpu.pipeline_mode<synchronous>, transform_indices = @transform_2, window_bounds = array<i64: 16, 32>}, {pipeline_mode = #tpu.pipeline_mode<synchronous>, transform_indices = @transform_3, window_bounds = array<i64: 1, 32>}, {pipeline_mode = #tpu.pipeline_mode<synchronous>, transform_indices = @transform_4, window_bounds = array<i64: 1, 32>}, {pipeline_mode = #tpu.pipeline_mode<synchronous>, transform_indices = @transform_5, window_bounds = array<i64: 1, 32>}, {transform_indices = @transform_6, window_bounds = array<i64: 8, 48>}]} {
    %c0 = arith.constant 0 : index
    %c0_0 = arith.constant 0 : index
    %0 = vector.load %arg1[%c0, %c0_0] : memref<8x16xf32, #tpu.memory_space<vmem>>, vector<8x16xf32>
    %c0_1 = arith.constant 0 : index
    %c0_2 = arith.constant 0 : index
    %1 = vector.load %arg2[%c0_1, %c0_2] : memref<1x16xf32, #tpu.memory_space<vmem>>, vector<1x16xf32>
    %2 = vector.broadcast %1 : vector<1x16xf32> to vector<8x16xf32>
    %3 = arith.subf %0, %2 : vector<8x16xf32>
    %c0_3 = arith.constant 0 : index
    %c0_4 = arith.constant 0 : index
    %4 = vector.load %arg3[%c0_3, %c0_4] : memref<16x32xf32, #tpu.memory_space<vmem>>, vector<16x32xf32>
    %cst = arith.constant dense<0.000000e+00> : vector<8x32xf32>
    %5 = tpu.matmul %3, %4, %cst {dimension_numbers = #tpu.dot_dimension_numbers<[1], [0], [0], [1], [0, 0, 1, 1], [], []>, precision = #tpu.contract_precision<fp32>} : vector<8x16xf32>, vector<16x32xf32>, vector<8x32xf32> -> vector<8x32xf32>
    %c0_5 = arith.constant 0 : index
    %c0_6 = arith.constant 0 : index
    %6 = vector.load %arg6[%c0_5, %c0_6] : memref<1x32xf32, #tpu.memory_space<vmem>>, vector<1x32xf32>
    %c0_7 = arith.constant 0 : index
    %c0_8 = arith.constant 0 : index
    %7 = vector.load %arg4[%c0_7, %c0_8] : memref<1x32xf32, #tpu.memory_space<vmem>>, vector<1x32xf32>
    %8 = arith.mulf %6, %7 : vector<1x32xf32>
    %9 = vector.broadcast %8 : vector<1x32xf32> to vector<8x32xf32>
    %10 = arith.mulf %5, %9 : vector<8x32xf32>
    %c0_9 = arith.constant 0 : index
    %c0_10 = arith.constant 0 : index
    %11 = vector.load %arg5[%c0_9, %c0_10] : memref<1x32xf32, #tpu.memory_space<vmem>>, vector<1x32xf32>
    %12 = vector.broadcast %11 : vector<1x32xf32> to vector<8x32xf32>
    %13 = arith.addf %10, %12 : vector<8x32xf32>
    %cst_11 = arith.constant 0.000000e+00 : f32
    %14 = vector.broadcast %cst_11 : f32 to vector<8x32xf32>
    %15 = arith.maximumf %13, %14 : vector<8x32xf32>
    %c0_12 = arith.constant 0 : index
    %c0_13 = arith.constant 0 : index
    %16 = vector.load %arg7[%c0_12, %c0_13] : memref<8x48xf32, #tpu.memory_space<vmem>>, vector<8x32xf32>
    tpu.vector_store %arg7[%c0_12, %c0_13], %15 {strides = array<i32>} : memref<8x48xf32, #tpu.memory_space<vmem>>, vector<8x32xf32>,
    %c0_14 = arith.constant 0 : index
    %c32 = arith.constant 32 : index
    %17 = vector.load %arg7[%c0_14, %c32] : memref<8x48xf32, #tpu.memory_space<vmem>>, vector<8x16xf32>
    tpu.vector_store %arg7[%c0_14, %c32], %0 {strides = array<i32>} : memref<8x48xf32, #tpu.memory_space<vmem>>, vector<8x16xf32>,
    return
  }
  func.func @transform_0(%arg0: i32) -> (i32, i32) {
    %c0_i32 = arith.constant 0 : i32
    %c0_i32_0 = arith.constant 0 : i32
    return %arg0, %c0_i32 : i32, i32
  }
  func.func @transform_1(%arg0: i32) -> (i32, i32) {
    %c0_i32 = arith.constant 0 : i32
    %c0_i32_0 = arith.constant 0 : i32
    %c0_i32_1 = arith.constant 0 : i32
    return %c0_i32, %c0_i32_0 : i32, i32
  }
  func.func @transform_2(%arg0: i32) -> (i32, i32) {
    %c0_i32 = arith.constant 0 : i32
    %c0_i32_0 = arith.constant 0 : i32
    %c0_i32_1 = arith.constant 0 : i32
    return %c0_i32, %c0_i32_0 : i32, i32
  }
  func.func @transform_3(%arg0: i32) -> (i32, i32) {
    %c0_i32 = arith.constant 0 : i32
    %c0_i32_0 = arith.constant 0 : i32
    %c0_i32_1 = arith.constant 0 : i32
    return %c0_i32, %c0_i32_0 : i32, i32
  }
  func.func @transform_4(%arg0: i32) -> (i32, i32) {
    %c0_i32 = arith.constant 0 : i32
    %c0_i32_0 = arith.constant 0 : i32
    %c0_i32_1 = arith.constant 0 : i32
    return %c0_i32, %c0_i32_0 : i32, i32
  }
  func.func @transform_5(%arg0: i32) -> (i32, i32) {
    %c0_i32 = arith.constant 0 : i32
    %c0_i32_0 = arith.constant 0 : i32
    %c0_i32_1 = arith.constant 0 : i32
    return %c0_i32, %c0_i32_0 : i32, i32
  }
  func.func @transform_6(%arg0: i32) -> (i32, i32) {
    %c0_i32 = arith.constant 0 : i32
    %c0_i32_0 = arith.constant 0 : i32
    return %arg0, %c0_i32 : i32, i32
  }
}

</mosaic_0001>

<llo_original>
// kernel: residual_forward.3
$region0: #{residual_forward.3}
  #allocation0 [shape = 'u32[]', space=smem, size = 0x4, offset = 0x4, fixed_abs, tag = 'smem constant byte address 0x4 - core index']
  #allocation1 [shape = 'u32[144,128]{1,0:T(1,128)}', space=vmem, size = 0x12000, scoped, tag = 'internal scratch']
  %s0 = inlined_call_operand.vmem [shape: f32[8,16], index: 0, kind: input, shape index: {}]
  %s1 = inlined_call_operand.vmem [shape: f32[1,16], index: 1, kind: input, shape index: {}]
  %s2 = inlined_call_operand.vmem [shape: f32[16,32], index: 2, kind: input, shape index: {}]
  %s3 = inlined_call_operand.vmem [shape: f32[1,32], index: 3, kind: input, shape index: {}]
  %s4 = inlined_call_operand.vmem [shape: f32[1,32], index: 4, kind: input, shape index: {}]
  %s5 = inlined_call_operand.vmem [shape: f32[1,32], index: 5, kind: input, shape index: {}]
  %s6 = inlined_call_operand.hbm [shape: f32[8,48], index: 6, kind: output, shape index: {}]
  %s7 = sld [smem:[#allocation0]]
  $region34: #{residual_forward.3} parent=0
    _
  %s9 = ssub.s32 1, %s7
  %s10 = scalar_select 0, %s9, %s7
  $region1: #{residual_forward.3} parent=0
    #allocation2 [shape = 'u8[4096]{0}', space=vmem, size = 0x1000, scoped, tag = 'output window, operand 0, single buffered']
    #allocation3 [shape = 's32[1]{0}', space=sflag, size = 0x4, scoped, tag = 'scoped memory for residual_forward.3']
    %11 = vsyncpa [#allocation3], 0
    // Predicated region
    $region2: #{residual_forward.3} parent=1 // pred_check
      _
    $region3: #{residual_forward.3} parent=1 // pred_check_branch
      %13 = sbr.rel (0) target = $region5
    $region4: #{residual_forward.3} parent=1 // pred_region
      _
    $region5: #{residual_forward.3} parent=1 // pred_fallthru
      _
    // Predicated region
    $region6: #{residual_forward.3} parent=1 // pred_check
      _
    $region7: #{residual_forward.3} parent=1 // pred_check_branch
      %15 = sbr.rel (0) target = $region9
    $region8: #{residual_forward.3} parent=1 // pred_region
      _
    $region9: #{residual_forward.3} parent=1 // pred_fallthru
      _
    // Predicated region
    $region10: #{residual_forward.3} parent=1 // pred_check
      _
    $region11: #{residual_forward.3} parent=1 // pred_check_branch
      %17 = sbr.rel (0) target = $region13
    $region12: #{residual_forward.3} parent=1 // pred_region
      _
    $region13: #{residual_forward.3} parent=1 // pred_fallthru
      _
    // Predicated region
    $region14: #{residual_forward.3} parent=1 // pred_check
      _
    $region15: #{residual_forward.3} parent=1 // pred_check_branch
      %19 = sbr.rel (0) target = $region17
    $region16: #{residual_forward.3} parent=1 // pred_region
      _
    $region17: #{residual_forward.3} parent=1 // pred_fallthru
      _
    // Predicated region
    $region18: #{residual_forward.3} parent=1 // pred_check
      _
    $region19: #{residual_forward.3} parent=1 // pred_check_branch
      %21 = sbr.rel (0) target = $region21
    $region20: #{residual_forward.3} parent=1 // pred_region
      _
    $region21: #{residual_forward.3} parent=1 // pred_fallthru
      _
    // Predicated region
    $region22: #{residual_forward.3} parent=1 // pred_check
      _
    $region23: #{residual_forward.3} parent=1 // pred_check_branch
      %23 = sbr.rel (0) target = $region25
    $region24: #{residual_forward.3} parent=1 // pred_region
      _
    $region25: #{residual_forward.3} parent=1 // pred_fallthru
      _
    %v24 = vld [vmem:[%s0] sm:$0xff]
    %v25 = vld [vmem:[%s1] sm:$0x1]
    %v27 = vlaneseq
    %v28 = vshrl.u32 %v27, 7
    %v29 = vsub.s32 0, %v28
    %v30 = vrot.slane %v25, %v29
    %v32 = vsub.f32 %v24, %v30
    %v33 = vld [vmem:[%s2] sm:$0xff]
    %v34 = vld [vmem:[%s2 + $0x8] sm:$0xff]
    %vm35 = vcmask 130048
    %v37 = vsel %vm35, %v32, 0
    %39 = vmatprep.subr.mxu0 0.0
    %40 = vmatpush1.msra.mxu0 0.0
    %41 = vmatprep.subr.mxu0 0.0
    %42 = vmatpush1.msra.mxu0 0.0
    %43 = vmatprep.subr.mxu0 0.0
    %44 = vmatpush1.msra.mxu0 0.0
    %45 = vmatprep.subr.mxu0 0.0
    %46 = vmatpush1.msra.mxu0 0.0
    %47 = vmatprep.subr.mxu0 0.0
    %48 = vmatpush1.msra.mxu0 0.0
    %49 = vmatprep.subr.mxu0 0.0
    %50 = vmatpush1.msra.mxu0 0.0
    %51 = vmatprep.subr.mxu0 0.0
    %52 = vmatpush1.msra.mxu0 0.0
    %53 = vmatprep.subr.mxu0 0.0
    %54 = vmatpush1.msra.mxu0 0.0
    %55 = vmatprep.subr.mxu0 0.0
    %56 = vmatpush1.msra.mxu0 0.0
    %57 = vmatprep.subr.mxu0 0.0
    %58 = vmatpush1.msra.mxu0 0.0
    %59 = vmatprep.subr.mxu0 0.0
    %60 = vmatpush1.msra.mxu0 0.0
    %61 = vmatprep.subr.mxu0 0.0
    %62 = vmatpush1.msra.mxu0 0.0
    %63 = vmatprep.subr.mxu0 0.0
    %64 = vmatpush1.msra.mxu0 0.0
    %65 = vmatprep.subr.mxu0 0.0
    %66 = vmatpush1.msra.mxu0 0.0
    %67 = vmatprep.subr.mxu0 0.0
    %v68 = vand.u32 %v34, 4294901760
    %69 = vmatpush1.msra.mxu0 %v68
    %70 = vmatprep.subr.mxu0 0.0
    %v71 = vand.u32 %v33, 4294901760
    %72 = vmatpush1.msra.mxu0 %v71
    %73 = vmatprep.subr.mxu0 0.0
    %74 = vmatpush2.msra.mxu0 0.0
    %75 = vmatprep.subr.mxu0 0.0
    %76 = vmatpush2.msra.mxu0 0.0
    %77 = vmatprep.subr.mxu0 0.0
    %78 = vmatpush2.msra.mxu0 0.0
    %79 = vmatprep.subr.mxu0 0.0
    %80 = vmatpush2.msra.mxu0 0.0
    %81 = vmatprep.subr.mxu0 0.0
    %82 = vmatpush2.msra.mxu0 0.0
    %83 = vmatprep.subr.mxu0 0.0
    %84 = vmatpush2.msra.mxu0 0.0
    %85 = vmatprep.subr.mxu0 0.0
    %86 = vmatpush2.msra.mxu0 0.0
    %87 = vmatprep.subr.mxu0 0.0
    %88 = vmatpush2.msra.mxu0 0.0
    %89 = vmatprep.subr.mxu0 0.0
    %90 = vmatpush2.msra.mxu0 0.0
    %91 = vmatprep.subr.mxu0 0.0
    %92 = vmatpush2.msra.mxu0 0.0
    %93 = vmatprep.subr.mxu0 0.0
    %94 = vmatpush2.msra.mxu0 0.0
    %95 = vmatprep.subr.mxu0 0.0
    %96 = vmatpush2.msra.mxu0 0.0
    %97 = vmatprep.subr.mxu0 0.0
    %98 = vmatpush2.msra.mxu0 0.0
    %99 = vmatprep.subr.mxu0 0.0
    %100 = vmatpush2.msra.mxu0 0.0
    %101 = vmatprep.subr.mxu0 0.0
    %102 = vmatpush2.msra.mxu0 0.0
    %103 = vmatprep.subr.mxu0 0.0
    %104 = vmatpush2.msra.mxu0 0.0
    %105 = vmatprep.mubr.f32.mxu0 0.0
    %v106 = vand.u32 %v37, 4294901760
    %v107 = vsub.f32 %v37, %v106
    %v108 = vand.u32 %v107, 4294901760
    %v109 = vsub.f32 %v107, %v108
    %v110 = vand.u32 %v109, 4294901760
    %111 = vmatmul.mubr.f32.gmra.mxu0 %v110
    %v112 = vpop.f32.mrf.mxu0
    %v113 = vadd.f32 0.0, %v112
    %v114 = vpop.f32.mrf.mxu0
    %115 = vdwg.mxu0
    %116 = vmatprep.subr.mxu0 0.0
    %117 = vmatpush1.msra.mxu0 0.0
    %118 = vmatprep.subr.mxu0 0.0
    %119 = vmatpush1.msra.mxu0 0.0
    %120 = vmatprep.subr.mxu0 0.0
    %121 = vmatpush1.msra.mxu0 0.0
    %122 = vmatprep.subr.mxu0 0.0
    %123 = vmatpush1.msra.mxu0 0.0
    %124 = vmatprep.subr.mxu0 0.0
    %125 = vmatpush1.msra.mxu0 0.0
    %126 = vmatprep.subr.mxu0 0.0
    %127 = vmatpush1.msra.mxu0 0.0
    %128 = vmatprep.subr.mxu0 0.0
    %129 = vmatpush1.msra.mxu0 0.0
    %130 = vmatprep.subr.mxu0 0.0
    %131 = vmatpush1.msra.mxu0 0.0
    %132 = vmatprep.subr.mxu0 0.0
    %133 = vmatpush1.msra.mxu0 0.0
    %134 = vmatprep.subr.mxu0 0.0
    %135 = vmatpush1.msra.mxu0 0.0
    %136 = vmatprep.subr.mxu0 0.0
    %137 = vmatpush1.msra.mxu0 0.0
    %138 = vmatprep.subr.mxu0 0.0
    %139 = vmatpush1.msra.mxu0 0.0
    %140 = vmatprep.subr.mxu0 0.0
    %141 = vmatpush1.msra.mxu0 0.0
    %142 = vmatprep.subr.mxu0 0.0
    %143 = vmatpush1.msra.mxu0 0.0
    %144 = vmatprep.subr.mxu0 0.0
    %v145 = vand.u32 %v34, 4294901760
    %v146 = vsub.f32 %v34, %v145
    %v147 = vand.u32 %v146, 4294901760
    %v148 = vsub.f32 %v146, %v147
    %v149 = vand.u32 %v148, 4294901760
    %150 = vmatpush1.msra.mxu0 %v149
    %151 = vmatprep.subr.mxu0 0.0
    %v152 = vand.u32 %v33, 4294901760
    %v153 = vsub.f32 %v33, %v152
    %v154 = vand.u32 %v153, 4294901760
    %v155 = vsub.f32 %v153, %v154
    %v156 = vand.u32 %v155, 4294901760
    %157 = vmatpush1.msra.mxu0 %v156
    %158 = vmatprep.subr.mxu0 0.0
    %159 = vmatpush2.msra.mxu0 0.0
    %160 = vmatprep.subr.mxu0 0.0
    %161 = vmatpush2.msra.mxu0 0.0
    %162 = vmatprep.subr.mxu0 0.0
    %163 = vmatpush2.msra.mxu0 0.0
    %164 = vmatprep.subr.mxu0 0.0
    %165 = vmatpush2.msra.mxu0 0.0
    %166 = vmatprep.subr.mxu0 0.0
    %167 = vmatpush2.msra.mxu0 0.0
    %168 = vmatprep.subr.mxu0 0.0
    %169 = vmatpush2.msra.mxu0 0.0
    %170 = vmatprep.subr.mxu0 0.0
    %171 = vmatpush2.msra.mxu0 0.0
    %172 = vmatprep.subr.mxu0 0.0
    %173 = vmatpush2.msra.mxu0 0.0
    %174 = vmatprep.subr.mxu0 0.0
    %175 = vmatpush2.msra.mxu0 0.0
    %176 = vmatprep.subr.mxu0 0.0
    %177 = vmatpush2.msra.mxu0 0.0
    %178 = vmatprep.subr.mxu0 0.0
    %179 = vmatpush2.msra.mxu0 0.0
    %180 = vmatprep.subr.mxu0 0.0
    %181 = vmatpush2.msra.mxu0 0.0
    %182 = vmatprep.subr.mxu0 0.0
    %183 = vmatpush2.msra.mxu0 0.0
    %184 = vmatprep.subr.mxu0 0.0
    %185 = vmatpush2.msra.mxu0 0.0
    %186 = vmatprep.subr.mxu0 0.0
    %187 = vmatpush2.msra.mxu0 0.0
    %188 = vmatprep.subr.mxu0 0.0
    %189 = vmatpush2.msra.mxu0 0.0
    %190 = vmatprep.mubr.f32.mxu0 0.0
    %v191 = vand.u32 %v37, 4294901760
    %192 = vmatmul.mubr.f32.gmra.mxu0 %v191
    %v193 = vpop.f32.mrf.mxu0
    %v194 = vadd.f32 %v113, %v193
    %v195 = vpop.f32.mrf.mxu0
    %196 = vdwg.mxu0
    %197 = vmatprep.subr.mxu0 0.0
    %198 = vmatpush1.msra.mxu0 0.0
    %199 = vmatprep.subr.mxu0 0.0
    %200 = vmatpush1.msra.mxu0 0.0
    %201 = vmatprep.subr.mxu0 0.0
    %202 = vmatpush1.msra.mxu0 0.0
    %203 = vmatprep.subr.mxu0 0.0
    %204 = vmatpush1.msra.mxu0 0.0
    %205 = vmatprep.subr.mxu0 0.0
    %206 = vmatpush1.msra.mxu0 0.0
    %207 = vmatprep.subr.mxu0 0.0
    %208 = vmatpush1.msra.mxu0 0.0
    %209 = vmatprep.subr.mxu0 0.0
    %210 = vmatpush1.msra.mxu0 0.0
    %211 = vmatprep.subr.mxu0 0.0
    %212 = vmatpush1.msra.mxu0 0.0
    %213 = vmatprep.subr.mxu0 0.0
    %214 = vmatpush1.msra.mxu0 0.0
    %215 = vmatprep.subr.mxu0 0.0
    %216 = vmatpush1.msra.mxu0 0.0
    %217 = vmatprep.subr.mxu0 0.0
    %218 = vmatpush1.msra.mxu0 0.0
    %219 = vmatprep.subr.mxu0 0.0
    %220 = vmatpush1.msra.mxu0 0.0
    %221 = vmatprep.subr.mxu0 0.0
    %222 = vmatpush1.msra.mxu0 0.0
    %223 = vmatprep.subr.mxu0 0.0
    %224 = vmatpush1.msra.mxu0 0.0
    %225 = vmatprep.subr.mxu0 0.0
    %v226 = vand.u32 %v34, 4294901760
    %v227 = vsub.f32 %v34, %v226
    %228 = vmatpush1.msra.mxu0 %v227
    %229 = vmatprep.subr.mxu0 0.0
    %v230 = vand.u32 %v33, 4294901760
    %v231 = vsub.f32 %v33, %v230
    %232 = vmatpush1.msra.mxu0 %v231
    %233 = vmatprep.subr.mxu0 0.0
    %234 = vmatpush2.msra.mxu0 0.0
    %235 = vmatprep.subr.mxu0 0.0
    %236 = vmatpush2.msra.mxu0 0.0
    %237 = vmatprep.subr.mxu0 0.0
    %238 = vmatpush2.msra.mxu0 0.0
    %239 = vmatprep.subr.mxu0 0.0
    %240 = vmatpush2.msra.mxu0 0.0
    %241 = vmatprep.subr.mxu0 0.0
    %242 = vmatpush2.msra.mxu0 0.0
    %243 = vmatprep.subr.mxu0 0.0
    %244 = vmatpush2.msra.mxu0 0.0
    %245 = vmatprep.subr.mxu0 0.0
    %246 = vmatpush2.msra.mxu0 0.0
    %247 = vmatprep.subr.mxu0 0.0
    %248 = vmatpush2.msra.mxu0 0.0
    %249 = vmatprep.subr.mxu0 0.0
    %250 = vmatpush2.msra.mxu0 0.0
    %251 = vmatprep.subr.mxu0 0.0
    %252 = vmatpush2.msra.mxu0 0.0
    %253 = vmatprep.subr.mxu0 0.0
    %254 = vmatpush2.msra.mxu0 0.0
    %255 = vmatprep.subr.mxu0 0.0
    %256 = vmatpush2.msra.mxu0 0.0
    %257 = vmatprep.subr.mxu0 0.0
    %258 = vmatpush2.msra.mxu0 0.0
    %259 = vmatprep.subr.mxu0 0.0
    %260 = vmatpush2.msra.mxu0 0.0
    %261 = vmatprep.subr.mxu0 0.0
    %262 = vmatpush2.msra.mxu0 0.0
    %263 = vmatprep.subr.mxu0 0.0
    %264 = vmatpush2.msra.mxu0 0.0
    %265 = vmatprep.mubr.f32.mxu0 0.0
    %v266 = vand.u32 %v37, 4294901760
    %v267 = vsub.f32 %v37, %v266
    %268 = vmatmul.mubr.f32.gmra.mxu0 %v267
    %v269 = vpop.f32.mrf.mxu0
    %v270 = vadd.f32 %v194, %v269
    %v271 = vpop.f32.mrf.mxu0
    %272 = vdwg.mxu0
    %273 = vmatprep.subr.mxu0 0.0
    %274 = vmatpush1.msra.mxu0 0.0
    %275 = vmatprep.subr.mxu0 0.0
    %276 = vmatpush1.msra.mxu0 0.0
    %277 = vmatprep.subr.mxu0 0.0
    %278 = vmatpush1.msra.mxu0 0.0
    %279 = vmatprep.subr.mxu0 0.0
    %280 = vmatpush1.msra.mxu0 0.0
    %281 = vmatprep.subr.mxu0 0.0
    %282 = vmatpush1.msra.mxu0 0.0
    %283 = vmatprep.subr.mxu0 0.0
    %284 = vmatpush1.msra.mxu0 0.0
    %285 = vmatprep.subr.mxu0 0.0
    %286 = vmatpush1.msra.mxu0 0.0
    %287 = vmatprep.subr.mxu0 0.0
    %288 = vmatpush1.msra.mxu0 0.0
    %289 = vmatprep.subr.mxu0 0.0
    %290 = vmatpush1.msra.mxu0 0.0
    %291 = vmatprep.subr.mxu0 0.0
    %292 = vmatpush1.msra.mxu0 0.0
    %293 = vmatprep.subr.mxu0 0.0
    %294 = vmatpush1.msra.mxu0 0.0
    %295 = vmatprep.subr.mxu0 0.0
    %296 = vmatpush1.msra.mxu0 0.0
    %297 = vmatprep.subr.mxu0 0.0
    %298 = vmatpush1.msra.mxu0 0.0
    %299 = vmatprep.subr.mxu0 0.0
    %300 = vmatpush1.msra.mxu0 0.0
    %301 = vmatprep.subr.mxu0 0.0
    %v302 = vand.u32 %v34, 4294901760
    %303 = vmatpush1.msra.mxu0 %v302
    %304 = vmatprep.subr.mxu0 0.0
    %v305 = vand.u32 %v33, 4294901760
    %306 = vmatpush1.msra.mxu0 %v305
    %307 = vmatprep.subr.mxu0 0.0
    %308 = vmatpush2.msra.mxu0 0.0
    %309 = vmatprep.subr.mxu0 0.0
    %310 = vmatpush2.msra.mxu0 0.0
    %311 = vmatprep.subr.mxu0 0.0
    %312 = vmatpush2.msra.mxu0 0.0
    %313 = vmatprep.subr.mxu0 0.0
    %314 = vmatpush2.msra.mxu0 0.0
    %315 = vmatprep.subr.mxu0 0.0
    %316 = vmatpush2.msra.mxu0 0.0
    %317 = vmatprep.subr.mxu0 0.0
    %318 = vmatpush2.msra.mxu0 0.0
    %319 = vmatprep.subr.mxu0 0.0
    %320 = vmatpush2.msra.mxu0 0.0
    %321 = vmatprep.subr.mxu0 0.0
    %322 = vmatpush2.msra.mxu0 0.0
    %323 = vmatprep.subr.mxu0 0.0
    %324 = vmatpush2.msra.mxu0 0.0
    %325 = vmatprep.subr.mxu0 0.0
    %326 = vmatpush2.msra.mxu0 0.0
    %327 = vmatprep.subr.mxu0 0.0
    %328 = vmatpush2.msra.mxu0 0.0
    %329 = vmatprep.subr.mxu0 0.0
    %330 = vmatpush2.msra.mxu0 0.0
    %331 = vmatprep.subr.mxu0 0.0
    %332 = vmatpush2.msra.mxu0 0.0
    %333 = vmatprep.subr.mxu0 0.0
    %334 = vmatpush2.msra.mxu0 0.0
    %335 = vmatprep.subr.mxu0 0.0
    %336 = vmatpush2.msra.mxu0 0.0
    %337 = vmatprep.subr.mxu0 0.0
    %338 = vmatpush2.msra.mxu0 0.0
    %339 = vmatprep.mubr.f32.mxu0 0.0
    %v340 = vand.u32 %v37, 4294901760
    %v341 = vsub.f32 %v37, %v340
    %v342 = vand.u32 %v341, 4294901760
    %343 = vmatmul.mubr.f32.gmra.mxu0 %v342
    %v344 = vpop.f32.mrf.mxu0
    %v345 = vadd.f32 %v270, %v344
    %v346 = vpop.f32.mrf.mxu0
    %347 = vdwg.mxu0
    %348 = vmatprep.subr.mxu0 0.0
    %349 = vmatpush1.msra.mxu0 0.0
    %350 = vmatprep.subr.mxu0 0.0
    %351 = vmatpush1.msra.mxu0 0.0
    %352 = vmatprep.subr.mxu0 0.0
    %353 = vmatpush1.msra.mxu0 0.0
    %354 = vmatprep.subr.mxu0 0.0
    %355 = vmatpush1.msra.mxu0 0.0
    %356 = vmatprep.subr.mxu0 0.0
    %357 = vmatpush1.msra.mxu0 0.0
    %358 = vmatprep.subr.mxu0 0.0
    %359 = vmatpush1.msra.mxu0 0.0
    %360 = vmatprep.subr.mxu0 0.0
    %361 = vmatpush1.msra.mxu0 0.0
    %362 = vmatprep.subr.mxu0 0.0
    %363 = vmatpush1.msra.mxu0 0.0
    %364 = vmatprep.subr.mxu0 0.0
    %365 = vmatpush1.msra.mxu0 0.0
    %366 = vmatprep.subr.mxu0 0.0
    %367 = vmatpush1.msra.mxu0 0.0
    %368 = vmatprep.subr.mxu0 0.0
    %369 = vmatpush1.msra.mxu0 0.0
    %370 = vmatprep.subr.mxu0 0.0
    %371 = vmatpush1.msra.mxu0 0.0
    %372 = vmatprep.subr.mxu0 0.0
    %373 = vmatpush1.msra.mxu0 0.0
    %374 = vmatprep.subr.mxu0 0.0
    %375 = vmatpush1.msra.mxu0 0.0
    %376 = vmatprep.subr.mxu0 0.0
    %v377 = vand.u32 %v34, 4294901760
    %v378 = vsub.f32 %v34, %v377
    %v379 = vand.u32 %v378, 4294901760
    %380 = vmatpush1.msra.mxu0 %v379
    %381 = vmatprep.subr.mxu0 0.0
    %v382 = vand.u32 %v33, 4294901760
    %v383 = vsub.f32 %v33, %v382
    %v384 = vand.u32 %v383, 4294901760
    %385 = vmatpush1.msra.mxu0 %v384
    %386 = vmatprep.subr.mxu0 0.0
    %387 = vmatpush2.msra.mxu0 0.0
    %388 = vmatprep.subr.mxu0 0.0
    %389 = vmatpush2.msra.mxu0 0.0
    %390 = vmatprep.subr.mxu0 0.0
    %391 = vmatpush2.msra.mxu0 0.0
    %392 = vmatprep.subr.mxu0 0.0
    %393 = vmatpush2.msra.mxu0 0.0
    %394 = vmatprep.subr.mxu0 0.0
    %395 = vmatpush2.msra.mxu0 0.0
    %396 = vmatprep.subr.mxu0 0.0
    %397 = vmatpush2.msra.mxu0 0.0
    %398 = vmatprep.subr.mxu0 0.0
    %399 = vmatpush2.msra.mxu0 0.0
    %400 = vmatprep.subr.mxu0 0.0
    %401 = vmatpush2.msra.mxu0 0.0
    %402 = vmatprep.subr.mxu0 0.0
    %403 = vmatpush2.msra.mxu0 0.0
    %404 = vmatprep.subr.mxu0 0.0
    %405 = vmatpush2.msra.mxu0 0.0
    %406 = vmatprep.subr.mxu0 0.0
    %407 = vmatpush2.msra.mxu0 0.0
    %408 = vmatprep.subr.mxu0 0.0
    %409 = vmatpush2.msra.mxu0 0.0
    %410 = vmatprep.subr.mxu0 0.0
    %411 = vmatpush2.msra.mxu0 0.0
    %412 = vmatprep.subr.mxu0 0.0
    %413 = vmatpush2.msra.mxu0 0.0
    %414 = vmatprep.subr.mxu0 0.0
    %415 = vmatpush2.msra.mxu0 0.0
    %416 = vmatprep.subr.mxu0 0.0
    %417 = vmatpush2.msra.mxu0 0.0
    %418 = vmatprep.mubr.f32.mxu0 0.0
    %v419 = vand.u32 %v37, 4294901760
    %420 = vmatmul.mubr.f32.gmra.mxu0 %v419
    %v421 = vpop.f32.mrf.mxu0
    %v422 = vadd.f32 %v345, %v421
    %v423 = vpop.f32.mrf.mxu0
    %424 = vdwg.mxu0
    %425 = vmatprep.subr.mxu0 0.0
    %426 = vmatpush1.msra.mxu0 0.0
    %427 = vmatprep.subr.mxu0 0.0
    %428 = vmatpush1.msra.mxu0 0.0
    %429 = vmatprep.subr.mxu0 0.0
    %430 = vmatpush1.msra.mxu0 0.0
    %431 = vmatprep.subr.mxu0 0.0
    %432 = vmatpush1.msra.mxu0 0.0
    %433 = vmatprep.subr.mxu0 0.0
    %434 = vmatpush1.msra.mxu0 0.0
    %435 = vmatprep.subr.mxu0 0.0
    %436 = vmatpush1.msra.mxu0 0.0
    %437 = vmatprep.subr.mxu0 0.0
    %438 = vmatpush1.msra.mxu0 0.0
    %439 = vmatprep.subr.mxu0 0.0
    %440 = vmatpush1.msra.mxu0 0.0
    %441 = vmatprep.subr.mxu0 0.0
    %442 = vmatpush1.msra.mxu0 0.0
    %443 = vmatprep.subr.mxu0 0.0
    %444 = vmatpush1.msra.mxu0 0.0
    %445 = vmatprep.subr.mxu0 0.0
    %446 = vmatpush1.msra.mxu0 0.0
    %447 = vmatprep.subr.mxu0 0.0
    %448 = vmatpush1.msra.mxu0 0.0
    %449 = vmatprep.subr.mxu0 0.0
    %450 = vmatpush1.msra.mxu0 0.0
    %451 = vmatprep.subr.mxu0 0.0
    %452 = vmatpush1.msra.mxu0 0.0
    %453 = vmatprep.subr.mxu0 0.0
    %v454 = vand.u32 %v34, 4294901760
    %455 = vmatpush1.msra.mxu0 %v454
    %456 = vmatprep.subr.mxu0 0.0
    %v457 = vand.u32 %v33, 4294901760
    %458 = vmatpush1.msra.mxu0 %v457
    %459 = vmatprep.subr.mxu0 0.0
    %460 = vmatpush2.msra.mxu0 0.0
    %461 = vmatprep.subr.mxu0 0.0
    %462 = vmatpush2.msra.mxu0 0.0
    %463 = vmatprep.subr.mxu0 0.0
    %464 = vmatpush2.msra.mxu0 0.0
    %465 = vmatprep.subr.mxu0 0.0
    %466 = vmatpush2.msra.mxu0 0.0
    %467 = vmatprep.subr.mxu0 0.0
    %468 = vmatpush2.msra.mxu0 0.0
    %469 = vmatprep.subr.mxu0 0.0
    %470 = vmatpush2.msra.mxu0 0.0
    %471 = vmatprep.subr.mxu0 0.0
    %472 = vmatpush2.msra.mxu0 0.0
    %473 = vmatprep.subr.mxu0 0.0
    %474 = vmatpush2.msra.mxu0 0.0
    %475 = vmatprep.subr.mxu0 0.0
    %476 = vmatpush2.msra.mxu0 0.0
    %477 = vmatprep.subr.mxu0 0.0
    %478 = vmatpush2.msra.mxu0 0.0
    %479 = vmatprep.subr.mxu0 0.0
    %480 = vmatpush2.msra.mxu0 0.0
    %481 = vmatprep.subr.mxu0 0.0
    %482 = vmatpush2.msra.mxu0 0.0
    %483 = vmatprep.subr.mxu0 0.0
    %484 = vmatpush2.msra.mxu0 0.0
    %485 = vmatprep.subr.mxu0 0.0
    %486 = vmatpush2.msra.mxu0 0.0
    %487 = vmatprep.subr.mxu0 0.0
    %488 = vmatpush2.msra.mxu0 0.0
    %489 = vmatprep.subr.mxu0 0.0
    %490 = vmatpush2.msra.mxu0 0.0
    %491 = vmatprep.mubr.f32.mxu0 0.0
    %v492 = vand.u32 %v37, 4294901760
    %493 = vmatmul.mubr.f32.gmra.mxu0 %v492
    %v494 = vpop.f32.mrf.mxu0
    %v495 = vadd.f32 %v422, %v494
    %v496 = vpop.f32.mrf.mxu0
    %497 = vdwg.mxu0
    %v498 = vld [vmem:[%s5] sm:$0x1]
    %v499 = vld [vmem:[%s3] sm:$0x1]
    %v500 = vmul.f32 %v498, %v499
    %v502 = vlaneseq
    %v503 = vshrl.u32 %v502, 7
    %v504 = vsub.s32 0, %v503
    %v505 = vrot.slane %v500, %v504
    %v507 = vmul.f32 %v495, %v505
    %v508 = vld [vmem:[%s4] sm:$0x1]
    %v510 = vlaneseq
    %v511 = vshrl.u32 %v510, 7
    %v512 = vsub.s32 0, %v511
    %v513 = vrot.slane %v508, %v512
    %v515 = vadd.f32 %v507, %v513
    %v516 = vmax.f32 %v515, 0.0
    %vm517 = vcmask 261120
    %518 = vst.msk [vmem:[#allocation2] sm:$0xff] %vm517, %v516
    %520 = vrot.lane.b32.xlu0 %v24, 32
    %v521 = vpop.permute.xlu0 %520
    %vm523 = vcmask 392448
    %524 = vst.msk [vmem:[#allocation2] sm:$0xff] %vm523, %v521
    // Predicated region
    $region26: #{residual_forward.3} parent=1 // pred_check
      _
    $region27: #{residual_forward.3} parent=1 // pred_check_branch
      %526 = sbr.rel (0) target = $region29
    $region28: #{residual_forward.3} parent=1 // pred_region
      %s528 = ssub.s32 128, 128
      %529 = vsyncadd [#allocation3], %s528
      %s531 = sshll.u32 [#allocation2], 4
      %s532 = int_to_ptr.vmem [resolvable:$true] %s531
      %534 = dma.vmem_to_hbm [thread:$0]  %s532, 128, %s6, [#allocation3]
    $region29: #{residual_forward.3} parent=1 // pred_fallthru
      _
    // Predicated region
    $region30: #{residual_forward.3} parent=1 // pred_check
      _
    $region31: #{residual_forward.3} parent=1 // pred_check_branch
      %536 = sbr.rel (0) target = $region33
    $region32: #{residual_forward.3} parent=1 // pred_region
      %537 = dma.done [#allocation3], 128
    $region33: #{residual_forward.3} parent=1 // pred_fallthru
      _
    %538 = vsyncpa [#allocation3], 1

// kernel: residual_forward.2
$region0: #{residual_forward.2}
  #allocation0 [shape = 'u32[]', space=smem, size = 0x4, offset = 0x4, fixed_abs, tag = 'smem constant byte address 0x4 - core index']
  #allocation1 [shape = 'u32[144,128]{1,0:T(1,128)}', space=vmem, size = 0x12000, scoped, tag = 'internal scratch']
  %s0 = inlined_call_operand.vmem [shape: f32[8,16], index: 0, kind: input, shape index: {}]
  %s1 = inlined_call_operand.vmem [shape: f32[1,16], index: 1, kind: input, shape index: {}]
  %s2 = inlined_call_operand.hbm [shape: f32[16,32], index: 2, kind: input, shape index: {}]
  %s3 = inlined_call_operand.vmem [shape: f32[1,32], index: 3, kind: output, shape index: {}]
  %s4 = sld [smem:[#allocation0]]
  $region34: #{residual_forward.2} parent=0
    _
  %s6 = ssub.s32 1, %s4
  %s7 = scalar_select 0, %s6, %s4
  $region1: #{residual_forward.2} parent=0
    #allocation2 [shape = 'u8[8192]{0}', space=vmem, size = 0x2000, scoped, tag = 'input window, operand 2, single buffered']
    #allocation3 [shape = 's32[1]{0}', space=sflag, size = 0x4, scoped, tag = 'scoped memory for residual_forward.2']
    %8 = vsyncpa [#allocation3], 0
    // Predicated region
    $region2: #{residual_forward.2} parent=1 // pred_check
      _
    $region3: #{residual_forward.2} parent=1 // pred_check_branch
      %10 = sbr.rel (0) target = $region5
    $region4: #{residual_forward.2} parent=1 // pred_region
      _
    $region5: #{residual_forward.2} parent=1 // pred_fallthru
      _
    // Predicated region
    $region6: #{residual_forward.2} parent=1 // pred_check
      _
    $region7: #{residual_forward.2} parent=1 // pred_check_branch
      %12 = sbr.rel (0) target = $region9
    $region8: #{residual_forward.2} parent=1 // pred_region
      _
    $region9: #{residual_forward.2} parent=1 // pred_fallthru
      _
    // Predicated region
    $region10: #{residual_forward.2} parent=1 // pred_check
      _
    $region11: #{residual_forward.2} parent=1 // pred_check_branch
      %14 = sbr.rel (0) target = $region13
    $region12: #{residual_forward.2} parent=1 // pred_region
      %s16 = ssub.s32 256, 256
      %17 = vsyncadd [#allocation3], %s16
      %s18 = sshll.u32 [#allocation2], 4
      %s19 = int_to_ptr.vmem [resolvable:$true] %s18
      %24 = dma.hbm_to_vmem [thread:$0]  %s2, 256, %s19, [#allocation3], 128, 128, 8
    $region13: #{residual_forward.2} parent=1 // pred_fallthru
      _
    // Predicated region
    $region14: #{residual_forward.2} parent=1 // pred_check
      _
    $region15: #{residual_forward.2} parent=1 // pred_check_branch
      %26 = sbr.rel (0) target = $region17
    $region16: #{residual_forward.2} parent=1 // pred_region
      %27 = dma.done [#allocation3], 256
    $region17: #{residual_forward.2} parent=1 // pred_fallthru
      _
    %p28 = scmp.eq.s32.totalorder 0, 0
    // Predicated region
    $region18: #{residual_forward.2} parent=1 // pred_check
      %p29 = pneg %p28
    $region19: #{residual_forward.2} parent=1 // pred_check_branch
      %31 = sbr.rel (%p29) target = $region21
    $region20: #{residual_forward.2} parent=1 // pred_region
      %vm32 = vcmask 253952
      %33 = vst.msk [vmem:[%s3] sm:$0x1] %vm32, 0.0
    $region21: #{residual_forward.2} parent=1 // pred_fallthru
      _
    %v34 = vld [vmem:[%s0] sm:$0xff]
    %v35 = vld [vmem:[%s1] sm:$0x1]
    %v37 = vlaneseq
    %v38 = vshrl.u32 %v37, 7
    %v39 = vsub.s32 0, %v38
    %v40 = vrot.slane %v35, %v39
    %v42 = vsub.f32 %v34, %v40
    %v43 = vld [vmem:[#allocation2] sm:$0xff]
    %v44 = vld [vmem:[#allocation2 + $0x8] sm:$0xff]
    %vm45 = vcmask 130048
    %v47 = vsel %vm45, %v42, 0
    %49 = vmatprep.subr.mxu0 0.0
    %50 = vmatpush1.msra.mxu0 0.0
    %51 = vmatprep.subr.mxu0 0.0
    %52 = vmatpush1.msra.mxu0 0.0
    %53 = vmatprep.subr.mxu0 0.0
    %54 = vmatpush1.msra.mxu0 0.0
    %55 = vmatprep.subr.mxu0 0.0
    %56 = vmatpush1.msra.mxu0 0.0
    %57 = vmatprep.subr.mxu0 0.0
    %58 = vmatpush1.msra.mxu0 0.0
    %59 = vmatprep.subr.mxu0 0.0
    %60 = vmatpush1.msra.mxu0 0.0
    %61 = vmatprep.subr.mxu0 0.0
    %62 = vmatpush1.msra.mxu0 0.0
    %63 = vmatprep.subr.mxu0 0.0
    %64 = vmatpush1.msra.mxu0 0.0
    %65 = vmatprep.subr.mxu0 0.0
    %66 = vmatpush1.msra.mxu0 0.0
    %67 = vmatprep.subr.mxu0 0.0
    %68 = vmatpush1.msra.mxu0 0.0
    %69 = vmatprep.subr.mxu0 0.0
    %70 = vmatpush1.msra.mxu0 0.0
    %71 = vmatprep.subr.mxu0 0.0
    %72 = vmatpush1.msra.mxu0 0.0
    %73 = vmatprep.subr.mxu0 0.0
    %74 = vmatpush1.msra.mxu0 0.0
    %75 = vmatprep.subr.mxu0 0.0
    %76 = vmatpush1.msra.mxu0 0.0
    %77 = vmatprep.subr.mxu0 0.0
    %v78 = vand.u32 %v44, 4294901760
    %79 = vmatpush1.msra.mxu0 %v78
    %80 = vmatprep.subr.mxu0 0.0
    %v81 = vand.u32 %v43, 4294901760
    %82 = vmatpush1.msra.mxu0 %v81
    %83 = vmatprep.subr.mxu0 0.0
    %84 = vmatpush2.msra.mxu0 0.0
    %85 = vmatprep.subr.mxu0 0.0
    %86 = vmatpush2.msra.mxu0 0.0
    %87 = vmatprep.subr.mxu0 0.0
    %88 = vmatpush2.msra.mxu0 0.0
    %89 = vmatprep.subr.mxu0 0.0
    %90 = vmatpush2.msra.mxu0 0.0
    %91 = vmatprep.subr.mxu0 0.0
    %92 = vmatpush2.msra.mxu0 0.0
    %93 = vmatprep.subr.mxu0 0.0
    %94 = vmatpush2.msra.mxu0 0.0
    %95 = vmatprep.subr.mxu0 0.0
    %96 = vmatpush2.msra.mxu0 0.0
    %97 = vmatprep.subr.mxu0 0.0
    %98 = vmatpush2.msra.mxu0 0.0
    %99 = vmatprep.subr.mxu0 0.0
    %100 = vmatpush2.msra.mxu0 0.0
    %101 = vmatprep.subr.mxu0 0.0
    %102 = vmatpush2.msra.mxu0 0.0
    %103 = vmatprep.subr.mxu0 0.0
    %104 = vmatpush2.msra.mxu0 0.0
    %105 = vmatprep.subr.mxu0 0.0
    %106 = vmatpush2.msra.mxu0 0.0
    %107 = vmatprep.subr.mxu0 0.0
    %108 = vmatpush2.msra.mxu0 0.0
    %109 = vmatprep.subr.mxu0 0.0
    %110 = vmatpush2.msra.mxu0 0.0
    %111 = vmatprep.subr.mxu0 0.0
    %112 = vmatpush2.msra.mxu0 0.0
    %113 = vmatprep.subr.mxu0 0.0
    %114 = vmatpush2.msra.mxu0 0.0
    %115 = vmatprep.mubr.f32.mxu0 0.0
    %v116 = vand.u32 %v47, 4294901760
    %v117 = vsub.f32 %v47, %v116
    %v118 = vand.u32 %v117, 4294901760
    %v119 = vsub.f32 %v117, %v118
    %v120 = vand.u32 %v119, 4294901760
    %121 = vmatmul.mubr.f32.gmra.mxu0 %v120
    %v122 = vpop.f32.mrf.mxu0
    %v123 = vadd.f32 0.0, %v122
    %v124 = vpop.f32.mrf.mxu0
    %125 = vdwg.mxu0
    %126 = vmatprep.subr.mxu0 0.0
    %127 = vmatpush1.msra.mxu0 0.0
    %128 = vmatprep.subr.mxu0 0.0
    %129 = vmatpush1.msra.mxu0 0.0
    %130 = vmatprep.subr.mxu0 0.0
    %131 = vmatpush1.msra.mxu0 0.0
    %132 = vmatprep.subr.mxu0 0.0
    %133 = vmatpush1.msra.mxu0 0.0
    %134 = vmatprep.subr.mxu0 0.0
    %135 = vmatpush1.msra.mxu0 0.0
    %136 = vmatprep.subr.mxu0 0.0
    %137 = vmatpush1.msra.mxu0 0.0
    %138 = vmatprep.subr.mxu0 0.0
    %139 = vmatpush1.msra.mxu0 0.0
    %140 = vmatprep.subr.mxu0 0.0
    %141 = vmatpush1.msra.mxu0 0.0
    %142 = vmatprep.subr.mxu0 0.0
    %143 = vmatpush1.msra.mxu0 0.0
    %144 = vmatprep.subr.mxu0 0.0
    %145 = vmatpush1.msra.mxu0 0.0
    %146 = vmatprep.subr.mxu0 0.0
    %147 = vmatpush1.msra.mxu0 0.0
    %148 = vmatprep.subr.mxu0 0.0
    %149 = vmatpush1.msra.mxu0 0.0
    %150 = vmatprep.subr.mxu0 0.0
    %151 = vmatpush1.msra.mxu0 0.0
    %152 = vmatprep.subr.mxu0 0.0
    %153 = vmatpush1.msra.mxu0 0.0
    %154 = vmatprep.subr.mxu0 0.0
    %v155 = vand.u32 %v44, 4294901760
    %v156 = vsub.f32 %v44, %v155
    %v157 = vand.u32 %v156, 4294901760
    %v158 = vsub.f32 %v156, %v157
    %v159 = vand.u32 %v158, 4294901760
    %160 = vmatpush1.msra.mxu0 %v159
    %161 = vmatprep.subr.mxu0 0.0
    %v162 = vand.u32 %v43, 4294901760
    %v163 = vsub.f32 %v43, %v162
    %v164 = vand.u32 %v163, 4294901760
    %v165 = vsub.f32 %v163, %v164
    %v166 = vand.u32 %v165, 4294901760
    %167 = vmatpush1.msra.mxu0 %v166
    %168 = vmatprep.subr.mxu0 0.0
    %169 = vmatpush2.msra.mxu0 0.0
    %170 = vmatprep.subr.mxu0 0.0
    %171 = vmatpush2.msra.mxu0 0.0
    %172 = vmatprep.subr.mxu0 0.0
    %173 = vmatpush2.msra.mxu0 0.0
    %174 = vmatprep.subr.mxu0 0.0
    %175 = vmatpush2.msra.mxu0 0.0
    %176 = vmatprep.subr.mxu0 0.0
    %177 = vmatpush2.msra.mxu0 0.0
    %178 = vmatprep.subr.mxu0 0.0
    %179 = vmatpush2.msra.mxu0 0.0
    %180 = vmatprep.subr.mxu0 0.0
    %181 = vmatpush2.msra.mxu0 0.0
    %182 = vmatprep.subr.mxu0 0.0
    %183 = vmatpush2.msra.mxu0 0.0
    %184 = vmatprep.subr.mxu0 0.0
    %185 = vmatpush2.msra.mxu0 0.0
    %186 = vmatprep.subr.mxu0 0.0
    %187 = vmatpush2.msra.mxu0 0.0
    %188 = vmatprep.subr.mxu0 0.0
    %189 = vmatpush2.msra.mxu0 0.0
    %190 = vmatprep.subr.mxu0 0.0
    %191 = vmatpush2.msra.mxu0 0.0
    %192 = vmatprep.subr.mxu0 0.0
    %193 = vmatpush2.msra.mxu0 0.0
    %194 = vmatprep.subr.mxu0 0.0
    %195 = vmatpush2.msra.mxu0 0.0
    %196 = vmatprep.subr.mxu0 0.0
    %197 = vmatpush2.msra.mxu0 0.0
    %198 = vmatprep.subr.mxu0 0.0
    %199 = vmatpush2.msra.mxu0 0.0
    %200 = vmatprep.mubr.f32.mxu0 0.0
    %v201 = vand.u32 %v47, 4294901760
    %202 = vmatmul.mubr.f32.gmra.mxu0 %v201
    %v203 = vpop.f32.mrf.mxu0
    %v204 = vadd.f32 %v123, %v203
    %v205 = vpop.f32.mrf.mxu0
    %206 = vdwg.mxu0
    %207 = vmatprep.subr.mxu0 0.0
    %208 = vmatpush1.msra.mxu0 0.0
    %209 = vmatprep.subr.mxu0 0.0
    %210 = vmatpush1.msra.mxu0 0.0
    %211 = vmatprep.subr.mxu0 0.0
    %212 = vmatpush1.msra.mxu0 0.0
    %213 = vmatprep.subr.mxu0 0.0
    %214 = vmatpush1.msra.mxu0 0.0
    %215 = vmatprep.subr.mxu0 0.0
    %216 = vmatpush1.msra.mxu0 0.0
    %217 = vmatprep.subr.mxu0 0.0
    %218 = vmatpush1.msra.mxu0 0.0
    %219 = vmatprep.subr.mxu0 0.0
    %220 = vmatpush1.msra.mxu0 0.0
    %221 = vmatprep.subr.mxu0 0.0
    %222 = vmatpush1.msra.mxu0 0.0
    %223 = vmatprep.subr.mxu0 0.0
    %224 = vmatpush1.msra.mxu0 0.0
    %225 = vmatprep.subr.mxu0 0.0
    %226 = vmatpush1.msra.mxu0 0.0
    %227 = vmatprep.subr.mxu0 0.0
    %228 = vmatpush1.msra.mxu0 0.0
    %229 = vmatprep.subr.mxu0 0.0
    %230 = vmatpush1.msra.mxu0 0.0
    %231 = vmatprep.subr.mxu0 0.0
    %232 = vmatpush1.msra.mxu0 0.0
    %233 = vmatprep.subr.mxu0 0.0
    %234 = vmatpush1.msra.mxu0 0.0
    %235 = vmatprep.subr.mxu0 0.0
    %v236 = vand.u32 %v44, 4294901760
    %v237 = vsub.f32 %v44, %v236
    %238 = vmatpush1.msra.mxu0 %v237
    %239 = vmatprep.subr.mxu0 0.0
    %v240 = vand.u32 %v43, 4294901760
    %v241 = vsub.f32 %v43, %v240
    %242 = vmatpush1.msra.mxu0 %v241
    %243 = vmatprep.subr.mxu0 0.0
    %244 = vmatpush2.msra.mxu0 0.0
    %245 = vmatprep.subr.mxu0 0.0
    %246 = vmatpush2.msra.mxu0 0.0
    %247 = vmatprep.subr.mxu0 0.0
    %248 = vmatpush2.msra.mxu0 0.0
    %249 = vmatprep.subr.mxu0 0.0
    %250 = vmatpush2.msra.mxu0 0.0
    %251 = vmatprep.subr.mxu0 0.0
    %252 = vmatpush2.msra.mxu0 0.0
    %253 = vmatprep.subr.mxu0 0.0
    %254 = vmatpush2.msra.mxu0 0.0
    %255 = vmatprep.subr.mxu0 0.0
    %256 = vmatpush2.msra.mxu0 0.0
    %257 = vmatprep.subr.mxu0 0.0
    %258 = vmatpush2.msra.mxu0 0.0
    %259 = vmatprep.subr.mxu0 0.0
    %260 = vmatpush2.msra.mxu0 0.0
    %261 = vmatprep.subr.mxu0 0.0
    %262 = vmatpush2.msra.mxu0 0.0
    %263 = vmatprep.subr.mxu0 0.0
    %264 = vmatpush2.msra.mxu0 0.0
    %265 = vmatprep.subr.mxu0 0.0
    %266 = vmatpush2.msra.mxu0 0.0
    %267 = vmatprep.subr.mxu0 0.0
    %268 = vmatpush2.msra.mxu0 0.0
    %269 = vmatprep.subr.mxu0 0.0
    %270 = vmatpush2.msra.mxu0 0.0
    %271 = vmatprep.subr.mxu0 0.0
    %272 = vmatpush2.msra.mxu0 0.0
    %273 = vmatprep.subr.mxu0 0.0
    %274 = vmatpush2.msra.mxu0 0.0
    %275 = vmatprep.mubr.f32.mxu0 0.0
    %v276 = vand.u32 %v47, 4294901760
    %v277 = vsub.f32 %v47, %v276
    %278 = vmatmul.mubr.f32.gmra.mxu0 %v277
    %v279 = vpop.f32.mrf.mxu0
    %v280 = vadd.f32 %v204, %v279
    %v281 = vpop.f32.mrf.mxu0
    %282 = vdwg.mxu0
    %283 = vmatprep.subr.mxu0 0.0
    %284 = vmatpush1.msra.mxu0 0.0
    %285 = vmatprep.subr.mxu0 0.0
    %286 = vmatpush1.msra.mxu0 0.0
    %287 = vmatprep.subr.mxu0 0.0
    %288 = vmatpush1.msra.mxu0 0.0
    %289 = vmatprep.subr.mxu0 0.0
    %290 = vmatpush1.msra.mxu0 0.0
    %291 = vmatprep.subr.mxu0 0.0
    %292 = vmatpush1.msra.mxu0 0.0
    %293 = vmatprep.subr.mxu0 0.0
    %294 = vmatpush1.msra.mxu0 0.0
    %295 = vmatprep.subr.mxu0 0.0
    %296 = vmatpush1.msra.mxu0 0.0
    %297 = vmatprep.subr.mxu0 0.0
    %298 = vmatpush1.msra.mxu0 0.0
    %299 = vmatprep.subr.mxu0 0.0
    %300 = vmatpush1.msra.mxu0 0.0
    %301 = vmatprep.subr.mxu0 0.0
    %302 = vmatpush1.msra.mxu0 0.0
    %303 = vmatprep.subr.mxu0 0.0
    %304 = vmatpush1.msra.mxu0 0.0
    %305 = vmatprep.subr.mxu0 0.0
    %306 = vmatpush1.msra.mxu0 0.0
    %307 = vmatprep.subr.mxu0 0.0
    %308 = vmatpush1.msra.mxu0 0.0
    %309 = vmatprep.subr.mxu0 0.0
    %310 = vmatpush1.msra.mxu0 0.0
    %311 = vmatprep.subr.mxu0 0.0
    %v312 = vand.u32 %v44, 4294901760
    %313 = vmatpush1.msra.mxu0 %v312
    %314 = vmatprep.subr.mxu0 0.0
    %v315 = vand.u32 %v43, 4294901760
    %316 = vmatpush1.msra.mxu0 %v315
    %317 = vmatprep.subr.mxu0 0.0
    %318 = vmatpush2.msra.mxu0 0.0
    %319 = vmatprep.subr.mxu0 0.0
    %320 = vmatpush2.msra.mxu0 0.0
    %321 = vmatprep.subr.mxu0 0.0
    %322 = vmatpush2.msra.mxu0 0.0
    %323 = vmatprep.subr.mxu0 0.0
    %324 = vmatpush2.msra.mxu0 0.0
    %325 = vmatprep.subr.mxu0 0.0
    %326 = vmatpush2.msra.mxu0 0.0
    %327 = vmatprep.subr.mxu0 0.0
    %328 = vmatpush2.msra.mxu0 0.0
    %329 = vmatprep.subr.mxu0 0.0
    %330 = vmatpush2.msra.mxu0 0.0
    %331 = vmatprep.subr.mxu0 0.0
    %332 = vmatpush2.msra.mxu0 0.0
    %333 = vmatprep.subr.mxu0 0.0
    %334 = vmatpush2.msra.mxu0 0.0
    %335 = vmatprep.subr.mxu0 0.0
    %336 = vmatpush2.msra.mxu0 0.0
    %337 = vmatprep.subr.mxu0 0.0
    %338 = vmatpush2.msra.mxu0 0.0
    %339 = vmatprep.subr.mxu0 0.0
    %340 = vmatpush2.msra.mxu0 0.0
    %341 = vmatprep.subr.mxu0 0.0
    %342 = vmatpush2.msra.mxu0 0.0
    %343 = vmatprep.subr.mxu0 0.0
    %344 = vmatpush2.msra.mxu0 0.0
    %345 = vmatprep.subr.mxu0 0.0
    %346 = vmatpush2.msra.mxu0 0.0
    %347 = vmatprep.subr.mxu0 0.0
    %348 = vmatpush2.msra.mxu0 0.0
    %349 = vmatprep.mubr.f32.mxu0 0.0
    %v350 = vand.u32 %v47, 4294901760
    %v351 = vsub.f32 %v47, %v350
    %v352 = vand.u32 %v351, 4294901760
    %353 = vmatmul.mubr.f32.gmra.mxu0 %v352
    %v354 = vpop.f32.mrf.mxu0
    %v355 = vadd.f32 %v280, %v354
    %v356 = vpop.f32.mrf.mxu0
    %357 = vdwg.mxu0
    %358 = vmatprep.subr.mxu0 0.0
    %359 = vmatpush1.msra.mxu0 0.0
    %360 = vmatprep.subr.mxu0 0.0
    %361 = vmatpush1.msra.mxu0 0.0
    %362 = vmatprep.subr.mxu0 0.0
    %363 = vmatpush1.msra.mxu0 0.0
    %364 = vmatprep.subr.mxu0 0.0
    %365 = vmatpush1.msra.mxu0 0.0
    %366 = vmatprep.subr.mxu0 0.0
    %367 = vmatpush1.msra.mxu0 0.0
    %368 = vmatprep.subr.mxu0 0.0
    %369 = vmatpush1.msra.mxu0 0.0
    %370 = vmatprep.subr.mxu0 0.0
    %371 = vmatpush1.msra.mxu0 0.0
    %372 = vmatprep.subr.mxu0 0.0
    %373 = vmatpush1.msra.mxu0 0.0
    %374 = vmatprep.subr.mxu0 0.0
    %375 = vmatpush1.msra.mxu0 0.0
    %376 = vmatprep.subr.mxu0 0.0
    %377 = vmatpush1.msra.mxu0 0.0
    %378 = vmatprep.subr.mxu0 0.0
    %379 = vmatpush1.msra.mxu0 0.0
    %380 = vmatprep.subr.mxu0 0.0
    %381 = vmatpush1.msra.mxu0 0.0
    %382 = vmatprep.subr.mxu0 0.0
    %383 = vmatpush1.msra.mxu0 0.0
    %384 = vmatprep.subr.mxu0 0.0
    %385 = vmatpush1.msra.mxu0 0.0
    %386 = vmatprep.subr.mxu0 0.0
    %v387 = vand.u32 %v44, 4294901760
    %v388 = vsub.f32 %v44, %v387
    %v389 = vand.u32 %v388, 4294901760
    %390 = vmatpush1.msra.mxu0 %v389
    %391 = vmatprep.subr.mxu0 0.0
    %v392 = vand.u32 %v43, 4294901760
    %v393 = vsub.f32 %v43, %v392
    %v394 = vand.u32 %v393, 4294901760
    %395 = vmatpush1.msra.mxu0 %v394
    %396 = vmatprep.subr.mxu0 0.0
    %397 = vmatpush2.msra.mxu0 0.0
    %398 = vmatprep.subr.mxu0 0.0
    %399 = vmatpush2.msra.mxu0 0.0
    %400 = vmatprep.subr.mxu0 0.0
    %401 = vmatpush2.msra.mxu0 0.0
    %402 = vmatprep.subr.mxu0 0.0
    %403 = vmatpush2.msra.mxu0 0.0
    %404 = vmatprep.subr.mxu0 0.0
    %405 = vmatpush2.msra.mxu0 0.0
    %406 = vmatprep.subr.mxu0 0.0
    %407 = vmatpush2.msra.mxu0 0.0
    %408 = vmatprep.subr.mxu0 0.0
    %409 = vmatpush2.msra.mxu0 0.0
    %410 = vmatprep.subr.mxu0 0.0
    %411 = vmatpush2.msra.mxu0 0.0
    %412 = vmatprep.subr.mxu0 0.0
    %413 = vmatpush2.msra.mxu0 0.0
    %414 = vmatprep.subr.mxu0 0.0
    %415 = vmatpush2.msra.mxu0 0.0
    %416 = vmatprep.subr.mxu0 0.0
    %417 = vmatpush2.msra.mxu0 0.0
    %418 = vmatprep.subr.mxu0 0.0
    %419 = vmatpush2.msra.mxu0 0.0
    %420 = vmatprep.subr.mxu0 0.0
    %421 = vmatpush2.msra.mxu0 0.0
    %422 = vmatprep.subr.mxu0 0.0
    %423 = vmatpush2.msra.mxu0 0.0
    %424 = vmatprep.subr.mxu0 0.0
    %425 = vmatpush2.msra.mxu0 0.0
    %426 = vmatprep.subr.mxu0 0.0
    %427 = vmatpush2.msra.mxu0 0.0
    %428 = vmatprep.mubr.f32.mxu0 0.0
    %v429 = vand.u32 %v47, 4294901760
    %430 = vmatmul.mubr.f32.gmra.mxu0 %v429
    %v431 = vpop.f32.mrf.mxu0
    %v432 = vadd.f32 %v355, %v431
    %v433 = vpop.f32.mrf.mxu0
    %434 = vdwg.mxu0
    %435 = vmatprep.subr.mxu0 0.0
    %436 = vmatpush1.msra.mxu0 0.0
    %437 = vmatprep.subr.mxu0 0.0
    %438 = vmatpush1.msra.mxu0 0.0
    %439 = vmatprep.subr.mxu0 0.0
    %440 = vmatpush1.msra.mxu0 0.0
    %441 = vmatprep.subr.mxu0 0.0
    %442 = vmatpush1.msra.mxu0 0.0
    %443 = vmatprep.subr.mxu0 0.0
    %444 = vmatpush1.msra.mxu0 0.0
    %445 = vmatprep.subr.mxu0 0.0
    %446 = vmatpush1.msra.mxu0 0.0
    %447 = vmatprep.subr.mxu0 0.0
    %448 = vmatpush1.msra.mxu0 0.0
    %449 = vmatprep.subr.mxu0 0.0
    %450 = vmatpush1.msra.mxu0 0.0
    %451 = vmatprep.subr.mxu0 0.0
    %452 = vmatpush1.msra.mxu0 0.0
    %453 = vmatprep.subr.mxu0 0.0
    %454 = vmatpush1.msra.mxu0 0.0
    %455 = vmatprep.subr.mxu0 0.0
    %456 = vmatpush1.msra.mxu0 0.0
    %457 = vmatprep.subr.mxu0 0.0
    %458 = vmatpush1.msra.mxu0 0.0
    %459 = vmatprep.subr.mxu0 0.0
    %460 = vmatpush1.msra.mxu0 0.0
    %461 = vmatprep.subr.mxu0 0.0
    %462 = vmatpush1.msra.mxu0 0.0
    %463 = vmatprep.subr.mxu0 0.0
    %v464 = vand.u32 %v44, 4294901760
    %465 = vmatpush1.msra.mxu0 %v464
    %466 = vmatprep.subr.mxu0 0.0
    %v467 = vand.u32 %v43, 4294901760
    %468 = vmatpush1.msra.mxu0 %v467
    %469 = vmatprep.subr.mxu0 0.0
    %470 = vmatpush2.msra.mxu0 0.0
    %471 = vmatprep.subr.mxu0 0.0
    %472 = vmatpush2.msra.mxu0 0.0
    %473 = vmatprep.subr.mxu0 0.0
    %474 = vmatpush2.msra.mxu0 0.0
    %475 = vmatprep.subr.mxu0 0.0
    %476 = vmatpush2.msra.mxu0 0.0
    %477 = vmatprep.subr.mxu0 0.0
    %478 = vmatpush2.msra.mxu0 0.0
    %479 = vmatprep.subr.mxu0 0.0
    %480 = vmatpush2.msra.mxu0 0.0
    %481 = vmatprep.subr.mxu0 0.0
    %482 = vmatpush2.msra.mxu0 0.0
    %483 = vmatprep.subr.mxu0 0.0
    %484 = vmatpush2.msra.mxu0 0.0
    %485 = vmatprep.subr.mxu0 0.0
    %486 = vmatpush2.msra.mxu0 0.0
    %487 = vmatprep.subr.mxu0 0.0
    %488 = vmatpush2.msra.mxu0 0.0
    %489 = vmatprep.subr.mxu0 0.0
    %490 = vmatpush2.msra.mxu0 0.0
    %491 = vmatprep.subr.mxu0 0.0
    %492 = vmatpush2.msra.mxu0 0.0
    %493 = vmatprep.subr.mxu0 0.0
    %494 = vmatpush2.msra.mxu0 0.0
    %495 = vmatprep.subr.mxu0 0.0
    %496 = vmatpush2.msra.mxu0 0.0
    %497 = vmatprep.subr.mxu0 0.0
    %498 = vmatpush2.msra.mxu0 0.0
    %499 = vmatprep.subr.mxu0 0.0
    %500 = vmatpush2.msra.mxu0 0.0
    %501 = vmatprep.mubr.f32.mxu0 0.0
    %v502 = vand.u32 %v47, 4294901760
    %503 = vmatmul.mubr.f32.gmra.mxu0 %v502
    %v504 = vpop.f32.mrf.mxu0
    %v505 = vadd.f32 %v432, %v504
    %v506 = vpop.f32.mrf.mxu0
    %507 = vdwg.mxu0
    %v508 = vld [vmem:[%s3] sm:$0x1]
    %v509 = vmul.f32 %v505, %v505
    %vm510 = vcmask 261120
    %v511 = vsel %vm510, %v509, 0.0
    %v512 = vrot.slane %v511, 4
    %v513 = vadd.f32 %v511, %v512
    %v514 = vrot.slane %v513, 2
    %v515 = vadd.f32 %v513, %v514
    %v516 = vrot.slane %v515, 1
    %v517 = vadd.f32 %v515, %v516
    %v518 = vadd.f32 %v508, %v517
    %vm519 = vcmask 253952
    %520 = vst.msk [vmem:[%s3] sm:$0x1] %vm519, %v518
    // Predicated region
    $region22: #{residual_forward.2} parent=1 // pred_check
      %p521 = pneg %p28
    $region23: #{residual_forward.2} parent=1 // pred_check_branch
      %523 = sbr.rel (%p521) target = $region25
    $region24: #{residual_forward.2} parent=1 // pred_region
      %v524 = vld [vmem:[%s3] sm:$0x1]
      %v525 = vrcp.pop 8.0
      %v526 = vmul.f32 %v524, %v525
      %v527 = vadd.f32 %v526, 1e-05
      %v528 = vrsqrt.pop %v527
      %529 = vst.msk [vmem:[%s3] sm:$0x1] %vm519, %v528
    $region25: #{residual_forward.2} parent=1 // pred_fallthru
      _
    // Predicated region
    $region26: #{residual_forward.2} parent=1 // pred_check
      _
    $region27: #{residual_forward.2} parent=1 // pred_check_branch
      %531 = sbr.rel (0) target = $region29
    $region28: #{residual_forward.2} parent=1 // pred_region
      _
    $region29: #{residual_forward.2} parent=1 // pred_fallthru
      _
    // Predicated region
    $region30: #{residual_forward.2} parent=1 // pred_check
      _
    $region31: #{residual_forward.2} parent=1 // pred_check_branch
      %533 = sbr.rel (0) target = $region33
    $region32: #{residual_forward.2} parent=1 // pred_region
      _
    $region33: #{residual_forward.2} parent=1 // pred_fallthru
      _
    %534 = vsyncpa [#allocation3], 1

</llo_original>
